<compile_context>
chip_gen: v7x
topology: tpu7x:2x2x1
jax: 0.10.0
libtpu: 0.0.40
codegen_flags: <defaults>
</compile_context>

<pallas_src>
import jax
import jax.numpy as jnp
from jax import lax
from jax.experimental import pallas as pl
from jax.experimental.pallas import tpu as pltpu


def _round_up(x, m):
    return ((x + m - 1) // m) * m


def _oltr_classifier_kernel(
    feat_ref,       # (B, Dp)        feature, zero-padded to Dp lanes
    w_fused_ref,    # (Dp, 2Cp+Dp)   [centroids^T | w_hall^T | w_sel^T]
    cent_ref,       # (Cp, Dp)       zero-padded centroids (memory keys)
    c_sq_ref,       # (1, Cp)        ||c_j||^2, +1e30 on padded classes
    b_hall_ref,     # (1, Cp)        hallucinator bias, -1e30 on padded classes
    b_sel_ref,      # (1, Dp)        selector bias, 0 on padded dims
    wc_t_ref,       # (Dp, Cp)       cosnorm weight^T, zero-padded
    col_scale_ref,  # (1, Cp)        scale / ||w_c||, 0 on padded classes
    logits_ref,     # (B, Cp)        output
):
    f32 = jnp.float32
    Cp = logits_ref.shape[1]

    f = feat_ref[...]                       # native dtype -> MXU operand

    # --- one fused MXU pass: [f.c_j | hallucinator | selector] ----------------
    fused = jnp.dot(f, w_fused_ref[...],
                    preferred_element_type=f32)            # (B, 2Cp+Dp) f32
    cross = fused[:, :Cp]                                   # f . c_j   (B, Cp)
    hall = fused[:, Cp:2 * Cp] + b_hall_ref[...].astype(f32)            # (B, Cp)
    sel_pre = fused[:, 2 * Cp:] + b_sel_ref[...].astype(f32)            # (B, Dp)

    f_f = f.astype(f32)

    # --- nearest-centroid reachability (no (B,C,D) expand, no sort) ----------
    # dist^2[i,j] = ||f_i||^2 + ||c_j||^2 - 2 f_i.c_j ; only the row-min is used.
    f_sq = jnp.sum(f_f * f_f, axis=1, keepdims=True)                    # (B, 1)
    dist_sq = f_sq + c_sq_ref[...].astype(f32) - 2.0 * cross            # (B, Cp)
    min_dist_sq = jnp.clip(jnp.min(dist_sq, axis=1, keepdims=True),
                           f32(0.01), f32(1.0e6))
    reach = f32(10.0) * lax.rsqrt(min_dist_sq)                          # (B, 1)

    # --- hallucinator softmax -> memory feature ------------------------------
    hall_max = jnp.max(hall, axis=1, keepdims=True)
    e = jnp.exp(hall - hall_max)
    values_memory = e / jnp.sum(e, axis=1, keepdims=True)               # (B, Cp)
    memory_feature = jnp.dot(values_memory, cent_ref[...],
                             preferred_element_type=f32)                # (B, Dp)

    # --- concept selector ------------------------------------------------------
    sel = jnp.tanh(sel_pre)                                             # (B, Dp)

    x = reach * (f_f + sel * memory_feature)                            # (B, Dp)

    # --- CosNorm classifier (weight norm + scale folded to output side) -------
    norm_x = jnp.sqrt(jnp.sum(x * x, axis=1, keepdims=True))            # (B, 1)
    # (norm_x / (1 + norm_x)) * (x / norm_x) == x / (1 + norm_x)
    ex = x / (f32(1.0) + norm_x)                                        # (B, Dp)
    logits = jnp.dot(ex, wc_t_ref[...], preferred_element_type=f32)     # (B, Cp)
    logits = logits * col_scale_ref[...].astype(f32)
    logits_ref[...] = logits.astype(logits_ref.dtype)


def prepare_oltr_params(centroids, w_hall, b_hall, w_sel, b_sel, w_cos,
                        *, cos_scale=16.0):
    """One-time prep of frozen parameters (concat / pad / hoisted norms)."""
    f32 = jnp.float32
    C, D = centroids.shape
    Cp = max(_round_up(C, 128), 128)
    Dp = max(_round_up(D, 128), 128)
    pc, pd = Cp - C, Dp - D

    cent_p = jnp.pad(centroids, ((0, pc), (0, pd)))          # (Cp, Dp)
    wh_p = jnp.pad(w_hall, ((0, pc), (0, pd)))               # (Cp, Dp)
    ws_p = jnp.pad(w_sel, ((0, pd), (0, pd)))                # (Dp, Dp)
    wc_p = jnp.pad(w_cos, ((0, pc), (0, pd)))                # (Cp, Dp)

    # Fused feature-side weight: one (B,Dp)x(Dp, 2Cp+Dp) matmul in the kernel.
    w_fused = jnp.concatenate([cent_p.T, wh_p.T, ws_p.T], axis=1)   # (Dp, 2Cp+Dp)

    # Hoisted parameter-only math.
    c_sq = jnp.sum(centroids.astype(f32) ** 2, axis=1)               # (C,)
    c_sq_p = jnp.pad(c_sq, (0, pc), constant_values=1e30).reshape(1, Cp)

    b_hall_p = jnp.pad(b_hall.astype(f32), (0, pc),
                       constant_values=-1e30).reshape(1, Cp)
    b_sel_p = jnp.pad(b_sel.astype(f32), (0, pd)).reshape(1, Dp)

    w_norm = jnp.sqrt(jnp.sum(w_cos.astype(f32) ** 2, axis=1))       # (C,)
    col_scale = jnp.pad(jnp.float32(cos_scale) / w_norm, (0, pc)).reshape(1, Cp)

    return dict(w_fused=w_fused, cent=cent_p, c_sq=c_sq_p,
                b_hall=b_hall_p, b_sel=b_sel_p, wc_t=wc_p.T,
                col_scale=col_scale, C=C, D=D, Cp=Cp, Dp=Dp)


def oltr_classifier_forward(feature, packed):
    """Pallas implementation of OLTR_classifier.forward -> logits (B, C)."""
    B, D = feature.shape
    C, Cp, Dp = packed["C"], packed["Cp"], packed["Dp"]
    assert D == packed["D"]

    feat_p = jnp.pad(feature, ((0, 0), (0, Dp - D)))   # lane-dense feature

    vmem = pl.BlockSpec(memory_space=pltpu.MemorySpace.VMEM)
    logits_p = pl.pallas_call(
        _oltr_classifier_kernel,
        out_shape=jax.ShapeDtypeStruct((B, Cp), jnp.float32),
        in_specs=[vmem] * 8,
        out_specs=vmem,
    )(feat_p, packed["w_fused"], packed["cent"], packed["c_sq"],
      packed["b_hall"], packed["b_sel"], packed["wc_t"], packed["col_scale"])

    return logits_p[:, :C]


def oltr_for_textcnn_forward(feature, packed):
    """Mirror of OLTR_For_Textcnn.forward given the already-extracted feature."""
    logits = oltr_classifier_forward(feature, packed)
    return logits, feature


def _oltr_classifier_ref(feature, centroids, w_hall, b_hall, w_sel, b_sel,
                         w_cos, cos_scale=16.0):
    """Pure-JAX reference mirroring the PyTorch forward exactly."""
    x_expand = feature[:, None, :]                     # (B, 1, D)
    cent_expand = centroids[None, :, :]                # (1, C, D)
    dist_cur = jnp.linalg.norm(x_expand - cent_expand, axis=2)  # (B, C)
    values_nn = jnp.sort(dist_cur, axis=1)
    values_nn = jnp.clip(values_nn, 0.1, 1000.0)
    reach = (10.0 / values_nn[:, 0])[:, None]          # (B, 1)
    values_memory = jax.nn.softmax(feature @ w_hall.T + b_hall, axis=1)
    memory_feature = values_memory @ centroids
    concept_selector = jnp.tanh(feature @ w_sel.T + b_sel)
    x = reach * (feature + concept_selector * memory_feature)
    norm_x = jnp.linalg.norm(x, axis=1, keepdims=True)
    ex = norm_x / (1.0 + norm_x) * (x / norm_x)
    ew = w_cos / jnp.linalg.norm(w_cos, axis=1, keepdims=True)
    return (cos_scale * ex) @ ew.T


if __name__ == "__main__":
    key = jax.random.PRNGKey(0)
    k_feat, k_cent, k_wh, k_bh, k_ws, k_bs, k_wc = jax.random.split(key, 7)

    # small shapes consistent with the module:
    #   feature_dim = len(filter_sizes) * filter_num = 3 * 32 = 96
    #   classes_num = 183 (hardcoded in OLTR_For_Textcnn)
    B = 8
    D = 3 * 32
    C = 183

    stdv = 1.0 / (D ** 0.5)
    feature = jax.random.normal(k_feat, (B, D), dtype=jnp.float32)
    centroids = jax.random.normal(k_cent, (C, D), dtype=jnp.float32)
    w_hall = jax.random.uniform(k_wh, (C, D), jnp.float32, -stdv, stdv)
    b_hall = jax.random.uniform(k_bh, (C,), jnp.float32, -stdv, stdv)
    w_sel = jax.random.uniform(k_ws, (D, D), jnp.float32, -stdv, stdv)
    b_sel = jax.random.uniform(k_bs, (D,), jnp.float32, -stdv, stdv)
    w_cos = jax.random.uniform(k_wc, (C, D), jnp.float32, -stdv, stdv)

    # One-time parameter prep (frozen params): fused weight, padding, hoisted
    # centroid norms and CosNorm column scales.
    packed = prepare_oltr_params(centroids, w_hall, b_hall, w_sel, b_sel,
                                 w_cos, cos_scale=16.0)

    logits, feat_out = oltr_for_textcnn_forward(feature, packed)
    logits = jax.block_until_ready(logits)

    ref = _oltr_classifier_ref(feature, centroids, w_hall, b_hall,
                               w_sel, b_sel, w_cos, cos_scale=16.0)
    assert logits.shape == (B, C), logits.shape
    assert feat_out.shape == (B, D), feat_out.shape
    assert jnp.allclose(logits, ref, rtol=1e-3, atol=1e-3), (
        float(jnp.max(jnp.abs(logits - ref))))

    print("KERNEL_OK")
</pallas_src>

<mosaic_0001>
module attributes {stable_mosaic.version = 11 : i64} {
  func.func @_oltr_classifier_kernel(%arg0: memref<8x128xf32, #tpu.memory_space<vmem>>, %arg1: memref<128x640xf32, #tpu.memory_space<vmem>>, %arg2: memref<256x128xf32, #tpu.memory_space<vmem>>, %arg3: memref<1x256xf32, #tpu.memory_space<vmem>>, %arg4: memref<1x256xf32, #tpu.memory_space<vmem>>, %arg5: memref<1x128xf32, #tpu.memory_space<vmem>>, %arg6: memref<128x256xf32, #tpu.memory_space<vmem>>, %arg7: memref<1x256xf32, #tpu.memory_space<vmem>>, %arg8: memref<8x256xf32, #tpu.memory_space<vmem>>) attributes {dimension_semantics = [], scalar_prefetch = 0 : i64, scratch_operands = 0 : i64, tpu.core_type = #tpu.core_type<tc>} {
    %c0 = arith.constant 0 : index
    %c0_0 = arith.constant 0 : index
    %0 = vector.load %arg0[%c0, %c0_0] : memref<8x128xf32, #tpu.memory_space<vmem>>, vector<8x128xf32>
    %c0_1 = arith.constant 0 : index
    %c0_2 = arith.constant 0 : index
    %1 = vector.load %arg1[%c0_1, %c0_2] : memref<128x640xf32, #tpu.memory_space<vmem>>, vector<128x640xf32>
    %cst = arith.constant dense<0.000000e+00> : vector<8x640xf32>
    %2 = tpu.matmul %0, %1, %cst {dimension_numbers = #tpu.dot_dimension_numbers<[1], [0], [0], [1], [0, 0, 1, 1], [], []>} : vector<8x128xf32>, vector<128x640xf32>, vector<8x640xf32> -> vector<8x640xf32>
    %3 = vector.extract_strided_slice %2 {offsets = [0, 0], sizes = [8, 256], strides = [1, 1]} : vector<8x640xf32> to vector<8x256xf32>
    %4 = vector.extract_strided_slice %2 {offsets = [0, 256], sizes = [8, 256], strides = [1, 1]} : vector<8x640xf32> to vector<8x256xf32>
    %c0_3 = arith.constant 0 : index
    %c0_4 = arith.constant 0 : index
    %5 = vector.load %arg4[%c0_3, %c0_4] : memref<1x256xf32, #tpu.memory_space<vmem>>, vector<1x256xf32>
    %6 = vector.broadcast %5 : vector<1x256xf32> to vector<8x256xf32>
    %7 = arith.addf %4, %6 : vector<8x256xf32>
    %8 = vector.extract_strided_slice %2 {offsets = [0, 512], sizes = [8, 128], strides = [1, 1]} : vector<8x640xf32> to vector<8x128xf32>
    %c0_5 = arith.constant 0 : index
    %c0_6 = arith.constant 0 : index
    %9 = vector.load %arg5[%c0_5, %c0_6] : memref<1x128xf32, #tpu.memory_space<vmem>>, vector<1x128xf32>
    %10 = vector.broadcast %9 : vector<1x128xf32> to vector<8x128xf32>
    %11 = arith.addf %8, %10 : vector<8x128xf32>
    %12 = arith.mulf %0, %0 : vector<8x128xf32>
    %cst_7 = arith.constant dense<0.000000e+00> : vector<8xf32>
    %13 = vector.multi_reduction <add>, %12, %cst_7 [1] : vector<8x128xf32> to vector<8xf32>
    %14 = vector.shape_cast %13 : vector<8xf32> to vector<8x1xf32>
    %c0_8 = arith.constant 0 : index
    %c0_9 = arith.constant 0 : index
    %15 = vector.load %arg3[%c0_8, %c0_9] : memref<1x256xf32, #tpu.memory_space<vmem>>, vector<1x256xf32>
    %16 = vector.broadcast %14 : vector<8x1xf32> to vector<8x256xf32>
    %17 = vector.broadcast %15 : vector<1x256xf32> to vector<8x256xf32>
    %18 = arith.addf %16, %17 : vector<8x256xf32>
    %cst_10 = arith.constant 2.000000e+00 : f32
    %19 = vector.broadcast %cst_10 : f32 to vector<8x256xf32>
    %20 = arith.mulf %19, %3 : vector<8x256xf32>
    %21 = arith.subf %18, %20 : vector<8x256xf32>
    %cst_11 = arith.constant dense<0x7F800000> : vector<8xf32>
    %22 = vector.multi_reduction <minimumf>, %21, %cst_11 [1] : vector<8x256xf32> to vector<8xf32>
    %23 = vector.shape_cast %22 : vector<8xf32> to vector<8x1xf32>
    %cst_12 = arith.constant 0.00999999977 : f32
    %cst_13 = arith.constant 1.000000e+06 : f32
    %24 = vector.broadcast %cst_12 : f32 to vector<8x1xf32>
    %25 = arith.maximumf %24, %23 : vector<8x1xf32>
    %26 = vector.broadcast %cst_13 : f32 to vector<8x1xf32>
    %27 = arith.minimumf %26, %25 : vector<8x1xf32>
    %28 = math.rsqrt %27 : vector<8x1xf32>
    %cst_14 = arith.constant 1.000000e+01 : f32
    %29 = vector.broadcast %cst_14 : f32 to vector<8x1xf32>
    %30 = arith.mulf %29, %28 : vector<8x1xf32>
    %cst_15 = arith.constant dense<0xFF800000> : vector<8xf32>
    %31 = vector.multi_reduction <maximumf>, %7, %cst_15 [1] : vector<8x256xf32> to vector<8xf32>
    %32 = vector.shape_cast %31 : vector<8xf32> to vector<8x1xf32>
    %33 = vector.broadcast %32 : vector<8x1xf32> to vector<8x256xf32>
    %34 = arith.subf %7, %33 : vector<8x256xf32>
    %35 = math.exp %34 : vector<8x256xf32>
    %cst_16 = arith.constant dense<0.000000e+00> : vector<8xf32>
    %36 = vector.multi_reduction <add>, %35, %cst_16 [1] : vector<8x256xf32> to vector<8xf32>
    %37 = vector.shape_cast %36 : vector<8xf32> to vector<8x1xf32>
    %38 = vector.broadcast %37 : vector<8x1xf32> to vector<8x256xf32>
    %39 = arith.divf %35, %38 : vector<8x256xf32>
    %c0_17 = arith.constant 0 : index
    %c0_18 = arith.constant 0 : index
    %40 = vector.load %arg2[%c0_17, %c0_18] : memref<256x128xf32, #tpu.memory_space<vmem>>, vector<256x128xf32>
    %cst_19 = arith.constant dense<0.000000e+00> : vector<8x128xf32>
    %41 = tpu.matmul %39, %40, %cst_19 {dimension_numbers = #tpu.dot_dimension_numbers<[1], [0], [0], [1], [0, 0, 1, 1], [], []>} : vector<8x256xf32>, vector<256x128xf32>, vector<8x128xf32> -> vector<8x128xf32>
    %42 = math.tanh %11 : vector<8x128xf32>
    %43 = arith.mulf %42, %41 : vector<8x128xf32>
    %44 = arith.addf %0, %43 : vector<8x128xf32>
    %45 = vector.broadcast %30 : vector<8x1xf32> to vector<8x128xf32>
    %46 = arith.mulf %45, %44 : vector<8x128xf32>
    %47 = arith.mulf %46, %46 : vector<8x128xf32>
    %cst_20 = arith.constant dense<0.000000e+00> : vector<8xf32>
    %48 = vector.multi_reduction <add>, %47, %cst_20 [1] : vector<8x128xf32> to vector<8xf32>
    %49 = vector.shape_cast %48 : vector<8xf32> to vector<8x1xf32>
    %50 = math.sqrt %49 : vector<8x1xf32>
    %cst_21 = arith.constant 1.000000e+00 : f32
    %51 = vector.broadcast %cst_21 : f32 to vector<8x1xf32>
    %52 = arith.addf %51, %50 : vector<8x1xf32>
    %53 = vector.broadcast %52 : vector<8x1xf32> to vector<8x128xf32>
    %54 = arith.divf %46, %53 : vector<8x128xf32>
    %c0_22 = arith.constant 0 : index
    %c0_23 = arith.constant 0 : index
    %55 = vector.load %arg6[%c0_22, %c0_23] : memref<128x256xf32, #tpu.memory_space<vmem>>, vector<128x256xf32>
    %cst_24 = arith.constant dense<0.000000e+00> : vector<8x256xf32>
    %56 = tpu.matmul %54, %55, %cst_24 {dimension_numbers = #tpu.dot_dimension_numbers<[1], [0], [0], [1], [0, 0, 1, 1], [], []>} : vector<8x128xf32>, vector<128x256xf32>, vector<8x256xf32> -> vector<8x256xf32>
    %c0_25 = arith.constant 0 : index
    %c0_26 = arith.constant 0 : index
    %57 = vector.load %arg7[%c0_25, %c0_26] : memref<1x256xf32, #tpu.memory_space<vmem>>, vector<1x256xf32>
    %58 = vector.broadcast %57 : vector<1x256xf32> to vector<8x256xf32>
    %59 = arith.mulf %56, %58 : vector<8x256xf32>
    %c0_27 = arith.constant 0 : index
    %c0_28 = arith.constant 0 : index
    %60 = vector.load %arg8[%c0_27, %c0_28] : memref<8x256xf32, #tpu.memory_space<vmem>>, vector<8x256xf32>
    tpu.vector_store %arg8[%c0_27, %c0_28], %59 {strides = array<i32>} : memref<8x256xf32, #tpu.memory_space<vmem>>, vector<8x256xf32>,
    return
  }
}

</mosaic_0001>

<llo_original>
// kernel: tpu_custom_call.1
$region0: #{tpu_custom_call.1}
  #allocation0 [shape = 'u32[]', space=smem, size = 0x4, offset = 0x4, fixed_abs, tag = 'smem constant byte address 0x4 - core index']
  #allocation1 [shape = 'u32[144,128]{1,0:T(1,128)}', space=vmem, size = 0x12000, scoped, tag = 'internal scratch']
  %s0 = inlined_call_operand.hbm [shape: f32[8,128], index: 0, kind: input, shape index: {}]
  %s1 = inlined_call_operand.hbm [shape: f32[128,640], index: 1, kind: input, shape index: {}]
  %s2 = inlined_call_operand.hbm [shape: f32[256,128], index: 2, kind: input, shape index: {}]
  %s3 = inlined_call_operand.vmem [shape: f32[1,256], index: 3, kind: input, shape index: {}]
  %s4 = inlined_call_operand.vmem [shape: f32[1,256], index: 4, kind: input, shape index: {}]
  %s5 = inlined_call_operand.vmem [shape: f32[1,128], index: 5, kind: input, shape index: {}]
  %s6 = inlined_call_operand.hbm [shape: f32[128,256], index: 6, kind: input, shape index: {}]
  %s7 = inlined_call_operand.vmem [shape: f32[1,256], index: 7, kind: input, shape index: {}]
  %s8 = inlined_call_operand.hbm [shape: f32[8,256], index: 8, kind: output, shape index: {}]
  %s9 = sld [smem:[#allocation0]]
  $region58: #{tpu_custom_call.1} parent=0
    _
  %s11 = ssub.s32 1, %s9
  %s12 = scalar_select 0, %s11, %s9
  $region1: #{tpu_custom_call.1} parent=0
    #allocation2 [shape = 'u8[4096]{0}', space=vmem, size = 0x1000, scoped, tag = 'input window, operand 0, single buffered']
    #allocation3 [shape = 's32[1]{0}', space=sflag, size = 0x4, scoped, tag = 'scoped memory for tpu_custom_call.1']
    #allocation4 [shape = 's32[1]{0}', space=sflag, size = 0x4, scoped, tag = 'scoped memory for tpu_custom_call.1']
    #allocation5 [shape = 'u8[327680]{0}', space=vmem, size = 0x50000, scoped, tag = 'input window, operand 1, single buffered']
    #allocation6 [shape = 's32[1]{0}', space=sflag, size = 0x4, scoped, tag = 'scoped memory for tpu_custom_call.1']
    #allocation7 [shape = 'u8[131072]{0}', space=vmem, size = 0x20000, scoped, tag = 'input window, operand 2, single buffered']
    #allocation8 [shape = 'u8[131072]{0}', space=vmem, size = 0x20000, scoped, tag = 'input window, operand 6, single buffered']
    #allocation9 [shape = 's32[1]{0}', space=sflag, size = 0x4, scoped, tag = 'scoped memory for tpu_custom_call.1']
    #allocation10 [shape = 'u8[8192]{0}', space=vmem, size = 0x2000, scoped, tag = 'output window, operand 0, single buffered']
    %13 = vsyncpa [#allocation3], 0
    %14 = vsyncpa [#allocation6], 0
    %15 = vsyncpa [#allocation9], 0
    %16 = vsyncpa [#allocation4], 0
    // Predicated region
    $region2: #{tpu_custom_call.1} parent=1 // pred_check
      _
    $region3: #{tpu_custom_call.1} parent=1 // pred_check_branch
      %18 = sbr.rel (0) target = $region5
    $region4: #{tpu_custom_call.1} parent=1 // pred_region
      %s20 = ssub.s32 128, 128
      %21 = vsyncadd [#allocation3], %s20
      %s23 = sshll.u32 [#allocation2], 4
      %s24 = int_to_ptr.vmem [resolvable:$true] %s23
      %26 = dma.hbm_to_vmem [thread:$0]  %s0, 128, %s24, [#allocation3]
    $region5: #{tpu_custom_call.1} parent=1 // pred_fallthru
      _
    // Predicated region
    $region6: #{tpu_custom_call.1} parent=1 // pred_check
      _
    $region7: #{tpu_custom_call.1} parent=1 // pred_check_branch
      %28 = sbr.rel (0) target = $region9
    $region8: #{tpu_custom_call.1} parent=1 // pred_region
      %s30 = ssub.s32 10240, 10240
      %31 = vsyncadd [#allocation6], %s30
      %s32 = sshll.u32 [#allocation5], 4
      %s33 = int_to_ptr.vmem [resolvable:$true] %s32
      %38 = dma.hbm_to_vmem [thread:$0]  %s1, 10240, %s33, [#allocation6], 640, 640, 40
    $region9: #{tpu_custom_call.1} parent=1 // pred_fallthru
      _
    // Predicated region
    $region10: #{tpu_custom_call.1} parent=1 // pred_check
      _
    $region11: #{tpu_custom_call.1} parent=1 // pred_check_branch
      %40 = sbr.rel (0) target = $region13
    $region12: #{tpu_custom_call.1} parent=1 // pred_region
      %s42 = ssub.s32 4096, 4096
      %43 = vsyncadd [#allocation6], %s42
      %s44 = sshll.u32 [#allocation7], 4
      %s45 = int_to_ptr.vmem [resolvable:$true] %s44
      %50 = dma.hbm_to_vmem [thread:$0]  %s2, 4096, %s45, [#allocation6], 128, 128, 8
    $region13: #{tpu_custom_call.1} parent=1 // pred_fallthru
      _
    // Predicated region
    $region14: #{tpu_custom_call.1} parent=1 // pred_check
      _
    $region15: #{tpu_custom_call.1} parent=1 // pred_check_branch
      %52 = sbr.rel (0) target = $region17
    $region16: #{tpu_custom_call.1} parent=1 // pred_region
      _
    $region17: #{tpu_custom_call.1} parent=1 // pred_fallthru
      _
    // Predicated region
    $region18: #{tpu_custom_call.1} parent=1 // pred_check
      _
    $region19: #{tpu_custom_call.1} parent=1 // pred_check_branch
      %54 = sbr.rel (0) target = $region21
    $region20: #{tpu_custom_call.1} parent=1 // pred_region
      _
    $region21: #{tpu_custom_call.1} parent=1 // pred_fallthru
      _
    // Predicated region
    $region22: #{tpu_custom_call.1} parent=1 // pred_check
      _
    $region23: #{tpu_custom_call.1} parent=1 // pred_check_branch
      %56 = sbr.rel (0) target = $region25
    $region24: #{tpu_custom_call.1} parent=1 // pred_region
      _
    $region25: #{tpu_custom_call.1} parent=1 // pred_fallthru
      _
    // Predicated region
    $region26: #{tpu_custom_call.1} parent=1 // pred_check
      _
    $region27: #{tpu_custom_call.1} parent=1 // pred_check_branch
      %58 = sbr.rel (0) target = $region29
    $region28: #{tpu_custom_call.1} parent=1 // pred_region
      %s60 = ssub.s32 4096, 4096
      %61 = vsyncadd [#allocation9], %s60
      %s62 = sshll.u32 [#allocation8], 4
      %s63 = int_to_ptr.vmem [resolvable:$true] %s62
      %68 = dma.hbm_to_vmem [thread:$0]  %s6, 4096, %s63, [#allocation9], 256, 256, 16
    $region29: #{tpu_custom_call.1} parent=1 // pred_fallthru
      _
    // Predicated region
    $region30: #{tpu_custom_call.1} parent=1 // pred_check
      _
    $region31: #{tpu_custom_call.1} parent=1 // pred_check_branch
      %70 = sbr.rel (0) target = $region33
    $region32: #{tpu_custom_call.1} parent=1 // pred_region
      _
    $region33: #{tpu_custom_call.1} parent=1 // pred_fallthru
      _
    // Predicated region
    $region34: #{tpu_custom_call.1} parent=1 // pred_check
      _
    $region35: #{tpu_custom_call.1} parent=1 // pred_check_branch
      %72 = sbr.rel (0) target = $region37
    $region36: #{tpu_custom_call.1} parent=1 // pred_region
      %73 = dma.done [#allocation3], 128
    $region37: #{tpu_custom_call.1} parent=1 // pred_fallthru
      _
    // Predicated region
    $region38: #{tpu_custom_call.1} parent=1 // pred_check
      _
    $region39: #{tpu_custom_call.1} parent=1 // pred_check_branch
      %75 = sbr.rel (0) target = $region41
    $region40: #{tpu_custom_call.1} parent=1 // pred_region
      %76 = dma.done [#allocation6], 10240
    $region41: #{tpu_custom_call.1} parent=1 // pred_fallthru
      _
    // Predicated region
    $region42: #{tpu_custom_call.1} parent=1 // pred_check
      _
    $region43: #{tpu_custom_call.1} parent=1 // pred_check_branch
      %78 = sbr.rel (0) target = $region45
    $region44: #{tpu_custom_call.1} parent=1 // pred_region
      %79 = dma.done [#allocation6], 4096
    $region45: #{tpu_custom_call.1} parent=1 // pred_fallthru
      _
    // Predicated region
    $region46: #{tpu_custom_call.1} parent=1 // pred_check
      _
    $region47: #{tpu_custom_call.1} parent=1 // pred_check_branch
      %81 = sbr.rel (0) target = $region49
    $region48: #{tpu_custom_call.1} parent=1 // pred_region
      %82 = dma.done [#allocation9], 4096
    $region49: #{tpu_custom_call.1} parent=1 // pred_fallthru
      _
    %v83 = vld [vmem:[#allocation2] sm:$0xff]
    %v84 = vld [vmem:[#allocation5] sm:$0xff]
    %v85 = vld [vmem:[#allocation5 + $0x8] sm:$0xff]
    %v86 = vld [vmem:[#allocation5 + $0x10] sm:$0xff]
    %v87 = vld [vmem:[#allocation5 + $0x18] sm:$0xff]
    %v88 = vld [vmem:[#allocation5 + $0x20] sm:$0xff]
    %v89 = vld [vmem:[#allocation5 + $0x28] sm:$0xff]
    %v90 = vld [vmem:[#allocation5 + $0x30] sm:$0xff]
    %v91 = vld [vmem:[#allocation5 + $0x38] sm:$0xff]
    %v92 = vld [vmem:[#allocation5 + $0x40] sm:$0xff]
    %v93 = vld [vmem:[#allocation5 + $0x48] sm:$0xff]
    %v94 = vld [vmem:[#allocation5 + $0x50] sm:$0xff]
    %v95 = vld [vmem:[#allocation5 + $0x58] sm:$0xff]
    %v96 = vld [vmem:[#allocation5 + $0x60] sm:$0xff]
    %v97 = vld [vmem:[#allocation5 + $0x68] sm:$0xff]
    %v98 = vld [vmem:[#allocation5 + $0x70] sm:$0xff]
    %v99 = vld [vmem:[#allocation5 + $0x78] sm:$0xff]
    %v100 = vld [vmem:[#allocation5 + $0x80] sm:$0xff]
    %v101 = vld [vmem:[#allocation5 + $0x88] sm:$0xff]
    %v102 = vld [vmem:[#allocation5 + $0x90] sm:$0xff]
    %v103 = vld [vmem:[#allocation5 + $0x98] sm:$0xff]
    %v104 = vld [vmem:[#allocation5 + $0xa0] sm:$0xff]
    %v105 = vld [vmem:[#allocation5 + $0xa8] sm:$0xff]
    %v106 = vld [vmem:[#allocation5 + $0xb0] sm:$0xff]
    %v107 = vld [vmem:[#allocation5 + $0xb8] sm:$0xff]
    %v108 = vld [vmem:[#allocation5 + $0xc0] sm:$0xff]
    %v109 = vld [vmem:[#allocation5 + $0xc8] sm:$0xff]
    %v110 = vld [vmem:[#allocation5 + $0xd0] sm:$0xff]
    %v111 = vld [vmem:[#allocation5 + $0xd8] sm:$0xff]
    %v112 = vld [vmem:[#allocation5 + $0xe0] sm:$0xff]
    %v113 = vld [vmem:[#allocation5 + $0xe8] sm:$0xff]
    %v114 = vld [vmem:[#allocation5 + $0xf0] sm:$0xff]
    %v115 = vld [vmem:[#allocation5 + $0xf8] sm:$0xff]
    %v116 = vld [vmem:[#allocation5 + $0x100] sm:$0xff]
    %v117 = vld [vmem:[#allocation5 + $0x108] sm:$0xff]
    %v118 = vld [vmem:[#allocation5 + $0x110] sm:$0xff]
    %v119 = vld [vmem:[#allocation5 + $0x118] sm:$0xff]
    %v120 = vld [vmem:[#allocation5 + $0x120] sm:$0xff]
    %v121 = vld [vmem:[#allocation5 + $0x128] sm:$0xff]
    %v122 = vld [vmem:[#allocation5 + $0x130] sm:$0xff]
    %v123 = vld [vmem:[#allocation5 + $0x138] sm:$0xff]
    %v124 = vld [vmem:[#allocation5 + $0x140] sm:$0xff]
    %v125 = vld [vmem:[#allocation5 + $0x148] sm:$0xff]
    %v126 = vld [vmem:[#allocation5 + $0x150] sm:$0xff]
    %v127 = vld [vmem:[#allocation5 + $0x158] sm:$0xff]
    %v128 = vld [vmem:[#allocation5 + $0x160] sm:$0xff]
    %v129 = vld [vmem:[#allocation5 + $0x168] sm:$0xff]
    %v130 = vld [vmem:[#allocation5 + $0x170] sm:$0xff]
    %v131 = vld [vmem:[#allocation5 + $0x178] sm:$0xff]
    %v132 = vld [vmem:[#allocation5 + $0x180] sm:$0xff]
    %v133 = vld [vmem:[#allocation5 + $0x188] sm:$0xff]
    %v134 = vld [vmem:[#allocation5 + $0x190] sm:$0xff]
    %v135 = vld [vmem:[#allocation5 + $0x198] sm:$0xff]
    %v136 = vld [vmem:[#allocation5 + $0x1a0] sm:$0xff]
    %v137 = vld [vmem:[#allocation5 + $0x1a8] sm:$0xff]
    %v138 = vld [vmem:[#allocation5 + $0x1b0] sm:$0xff]
    %v139 = vld [vmem:[#allocation5 + $0x1b8] sm:$0xff]
    %v140 = vld [vmem:[#allocation5 + $0x1c0] sm:$0xff]
    %v141 = vld [vmem:[#allocation5 + $0x1c8] sm:$0xff]
    %v142 = vld [vmem:[#allocation5 + $0x1d0] sm:$0xff]
    %v143 = vld [vmem:[#allocation5 + $0x1d8] sm:$0xff]
    %v144 = vld [vmem:[#allocation5 + $0x1e0] sm:$0xff]
    %v145 = vld [vmem:[#allocation5 + $0x1e8] sm:$0xff]
    %v146 = vld [vmem:[#allocation5 + $0x1f0] sm:$0xff]
    %v147 = vld [vmem:[#allocation5 + $0x1f8] sm:$0xff]
    %v148 = vld [vmem:[#allocation5 + $0x200] sm:$0xff]
    %v149 = vld [vmem:[#allocation5 + $0x208] sm:$0xff]
    %v150 = vld [vmem:[#allocation5 + $0x210] sm:$0xff]
    %v151 = vld [vmem:[#allocation5 + $0x218] sm:$0xff]
    %v152 = vld [vmem:[#allocation5 + $0x220] sm:$0xff]
    %v153 = vld [vmem:[#allocation5 + $0x228] sm:$0xff]
    %v154 = vld [vmem:[#allocation5 + $0x230] sm:$0xff]
    %v155 = vld [vmem:[#allocation5 + $0x238] sm:$0xff]
    %v156 = vld [vmem:[#allocation5 + $0x240] sm:$0xff]
    %v157 = vld [vmem:[#allocation5 + $0x248] sm:$0xff]
    %v158 = vld [vmem:[#allocation5 + $0x250] sm:$0xff]
    %v159 = vld [vmem:[#allocation5 + $0x258] sm:$0xff]
    %v160 = vld [vmem:[#allocation5 + $0x260] sm:$0xff]
    %v161 = vld [vmem:[#allocation5 + $0x268] sm:$0xff]
    %v162 = vld [vmem:[#allocation5 + $0x270] sm:$0xff]
    %v163 = vld [vmem:[#allocation5 + $0x278] sm:$0xff]
    %164 = vmatprep.subr.mxu0 %v85
    %165 = vmatpush1.msra.mxu0 %v84
    %166 = vmatprep.subr.mxu0 %v90
    %167 = vmatpush1.msra.mxu0 %v89
    %168 = vmatprep.subr.mxu0 %v95
    %169 = vmatpush1.msra.mxu0 %v94
    %170 = vmatprep.subr.mxu0 %v100
    %171 = vmatpush1.msra.mxu0 %v99
    %172 = vmatprep.subr.mxu0 %v105
    %173 = vmatpush1.msra.mxu0 %v104
    %174 = vmatprep.subr.mxu0 %v110
    %175 = vmatpush1.msra.mxu0 %v109
    %176 = vmatprep.subr.mxu0 %v115
    %177 = vmatpush1.msra.mxu0 %v114
    %178 = vmatprep.subr.mxu0 %v120
    %179 = vmatpush1.msra.mxu0 %v119
    %180 = vmatprep.subr.mxu0 %v125
    %181 = vmatpush1.msra.mxu0 %v124
    %182 = vmatprep.subr.mxu0 %v130
    %183 = vmatpush1.msra.mxu0 %v129
    %184 = vmatprep.subr.mxu0 %v135
    %185 = vmatpush1.msra.mxu0 %v134
    %186 = vmatprep.subr.mxu0 %v140
    %187 = vmatpush1.msra.mxu0 %v139
    %188 = vmatprep.subr.mxu0 %v145
    %189 = vmatpush1.msra.mxu0 %v144
    %190 = vmatprep.subr.mxu0 %v150
    %191 = vmatpush1.msra.mxu0 %v149
    %192 = vmatprep.subr.mxu0 %v155
    %193 = vmatpush1.msra.mxu0 %v154
    %194 = vmatprep.subr.mxu0 %v160
    %195 = vmatpush1.msra.mxu0 %v159
    %196 = vmatprep.subr.mxu0 0.0
    %197 = vmatpush1.msra.mxu0 0.0
    %198 = vmatprep.subr.mxu0 0.0
    %199 = vmatpush1.msra.mxu0 0.0
    %200 = vmatprep.subr.mxu0 0.0
    %201 = vmatpush1.msra.mxu0 0.0
    %202 = vmatprep.subr.mxu0 0.0
    %203 = vmatpush1.msra.mxu0 0.0
    %204 = vmatprep.subr.mxu0 0.0
    %205 = vmatpush1.msra.mxu0 0.0
    %206 = vmatprep.subr.mxu0 0.0
    %207 = vmatpush1.msra.mxu0 0.0
    %208 = vmatprep.subr.mxu0 0.0
    %209 = vmatpush1.msra.mxu0 0.0
    %210 = vmatprep.subr.mxu0 0.0
    %211 = vmatpush1.msra.mxu0 0.0
    %212 = vmatprep.subr.mxu0 0.0
    %213 = vmatpush1.msra.mxu0 0.0
    %214 = vmatprep.subr.mxu0 0.0
    %215 = vmatpush1.msra.mxu0 0.0
    %216 = vmatprep.subr.mxu0 0.0
    %217 = vmatpush1.msra.mxu0 0.0
    %218 = vmatprep.subr.mxu0 0.0
    %219 = vmatpush1.msra.mxu0 0.0
    %220 = vmatprep.subr.mxu0 0.0
    %221 = vmatpush1.msra.mxu0 0.0
    %222 = vmatprep.subr.mxu0 0.0
    %223 = vmatpush1.msra.mxu0 0.0
    %224 = vmatprep.subr.mxu0 0.0
    %225 = vmatpush1.msra.mxu0 0.0
    %226 = vmatprep.subr.mxu0 0.0
    %227 = vmatpush1.msra.mxu0 0.0
    %228 = vmatprep.mubr.f32.mxu0 0.0
    %229 = vmatmul.mubr.f32.gmra.mrb[0].mxu0 %v83
    %v230 = vpop.f32.mrb[0].mxu0
    %v231 = vadd.f32 0.0, %v230
    %v232 = vpop.f32.mrb[0].mxu0
    %v233 = vadd.f32 0.0, %v232
    %234 = vdwg.mxu0
    %235 = vmatprep.subr.mxu0 %v87
    %236 = vmatpush1.msra.mxu0 %v86
    %237 = vmatprep.subr.mxu0 %v92
    %238 = vmatpush1.msra.mxu0 %v91
    %239 = vmatprep.subr.mxu0 %v97
    %240 = vmatpush1.msra.mxu0 %v96
    %241 = vmatprep.subr.mxu0 %v102
    %242 = vmatpush1.msra.mxu0 %v101
    %243 = vmatprep.subr.mxu0 %v107
    %244 = vmatpush1.msra.mxu0 %v106
    %245 = vmatprep.subr.mxu0 %v112
    %246 = vmatpush1.msra.mxu0 %v111
    %247 = vmatprep.subr.mxu0 %v117
    %248 = vmatpush1.msra.mxu0 %v116
    %249 = vmatprep.subr.mxu0 %v122
    %250 = vmatpush1.msra.mxu0 %v121
    %251 = vmatprep.subr.mxu0 %v127
    %252 = vmatpush1.msra.mxu0 %v126
    %253 = vmatprep.subr.mxu0 %v132
    %254 = vmatpush1.msra.mxu0 %v131
    %255 = vmatprep.subr.mxu0 %v137
    %256 = vmatpush1.msra.mxu0 %v136
    %257 = vmatprep.subr.mxu0 %v142
    %258 = vmatpush1.msra.mxu0 %v141
    %259 = vmatprep.subr.mxu0 %v147
    %260 = vmatpush1.msra.mxu0 %v146
    %261 = vmatprep.subr.mxu0 %v152
    %262 = vmatpush1.msra.mxu0 %v151
    %263 = vmatprep.subr.mxu0 %v157
    %264 = vmatpush1.msra.mxu0 %v156
    %265 = vmatprep.subr.mxu0 %v162
    %266 = vmatpush1.msra.mxu0 %v161
    %267 = vmatprep.subr.mxu0 0.0
    %268 = vmatpush1.msra.mxu0 0.0
    %269 = vmatprep.subr.mxu0 0.0
    %270 = vmatpush1.msra.mxu0 0.0
    %271 = vmatprep.subr.mxu0 0.0
    %272 = vmatpush1.msra.mxu0 0.0
    %273 = vmatprep.subr.mxu0 0.0
    %274 = vmatpush1.msra.mxu0 0.0
    %275 = vmatprep.subr.mxu0 0.0
    %276 = vmatpush1.msra.mxu0 0.0
    %277 = vmatprep.subr.mxu0 0.0
    %278 = vmatpush1.msra.mxu0 0.0
    %279 = vmatprep.subr.mxu0 0.0
    %280 = vmatpush1.msra.mxu0 0.0
    %281 = vmatprep.subr.mxu0 0.0
    %282 = vmatpush1.msra.mxu0 0.0
    %283 = vmatprep.subr.mxu0 0.0
    %284 = vmatpush1.msra.mxu0 0.0
    %285 = vmatprep.subr.mxu0 0.0
    %286 = vmatpush1.msra.mxu0 0.0
    %287 = vmatprep.subr.mxu0 0.0
    %288 = vmatpush1.msra.mxu0 0.0
    %289 = vmatprep.subr.mxu0 0.0
    %290 = vmatpush1.msra.mxu0 0.0
    %291 = vmatprep.subr.mxu0 0.0
    %292 = vmatpush1.msra.mxu0 0.0
    %293 = vmatprep.subr.mxu0 0.0
    %294 = vmatpush1.msra.mxu0 0.0
    %295 = vmatprep.subr.mxu0 0.0
    %296 = vmatpush1.msra.mxu0 0.0
    %297 = vmatprep.subr.mxu0 0.0
    %298 = vmatpush1.msra.mxu0 0.0
    %299 = vmatprep.mubr.f32.mxu0 0.0
    %300 = vmatmul.mubr.f32.gmra.mrb[0].mxu0 %v83
    %v301 = vpop.f32.mrb[0].mxu0
    %v302 = vadd.f32 0.0, %v301
    %v303 = vpop.f32.mrb[0].mxu0
    %v304 = vadd.f32 0.0, %v303
    %305 = vdwg.mxu0
    %306 = vmatprep.subr.mxu0 0.0
    %307 = vmatpush1.msra.mxu0 %v88
    %308 = vmatprep.subr.mxu0 0.0
    %309 = vmatpush1.msra.mxu0 %v93
    %310 = vmatprep.subr.mxu0 0.0
    %311 = vmatpush1.msra.mxu0 %v98
    %312 = vmatprep.subr.mxu0 0.0
    %313 = vmatpush1.msra.mxu0 %v103
    %314 = vmatprep.subr.mxu0 0.0
    %315 = vmatpush1.msra.mxu0 %v108
    %316 = vmatprep.subr.mxu0 0.0
    %317 = vmatpush1.msra.mxu0 %v113
    %318 = vmatprep.subr.mxu0 0.0
    %319 = vmatpush1.msra.mxu0 %v118
    %320 = vmatprep.subr.mxu0 0.0
    %321 = vmatpush1.msra.mxu0 %v123
    %322 = vmatprep.subr.mxu0 0.0
    %323 = vmatpush1.msra.mxu0 %v128
    %324 = vmatprep.subr.mxu0 0.0
    %325 = vmatpush1.msra.mxu0 %v133
    %326 = vmatprep.subr.mxu0 0.0
    %327 = vmatpush1.msra.mxu0 %v138
    %328 = vmatprep.subr.mxu0 0.0
    %329 = vmatpush1.msra.mxu0 %v143
    %330 = vmatprep.subr.mxu0 0.0
    %331 = vmatpush1.msra.mxu0 %v148
    %332 = vmatprep.subr.mxu0 0.0
    %333 = vmatpush1.msra.mxu0 %v153
    %334 = vmatprep.subr.mxu0 0.0
    %335 = vmatpush1.msra.mxu0 %v158
    %336 = vmatprep.subr.mxu0 0.0
    %337 = vmatpush1.msra.mxu0 %v163
    %338 = vmatprep.subr.mxu0 0.0
    %339 = vmatpush1.msra.mxu0 0.0
    %340 = vmatprep.subr.mxu0 0.0
    %341 = vmatpush1.msra.mxu0 0.0
    %342 = vmatprep.subr.mxu0 0.0
    %343 = vmatpush1.msra.mxu0 0.0
    %344 = vmatprep.subr.mxu0 0.0
    %345 = vmatpush1.msra.mxu0 0.0
    %346 = vmatprep.subr.mxu0 0.0
    %347 = vmatpush1.msra.mxu0 0.0
    %348 = vmatprep.subr.mxu0 0.0
    %349 = vmatpush1.msra.mxu0 0.0
    %350 = vmatprep.subr.mxu0 0.0
    %351 = vmatpush1.msra.mxu0 0.0
    %352 = vmatprep.subr.mxu0 0.0
    %353 = vmatpush1.msra.mxu0 0.0
    %354 = vmatprep.subr.mxu0 0.0
    %355 = vmatpush1.msra.mxu0 0.0
    %356 = vmatprep.subr.mxu0 0.0
    %357 = vmatpush1.msra.mxu0 0.0
    %358 = vmatprep.subr.mxu0 0.0
    %359 = vmatpush1.msra.mxu0 0.0
    %360 = vmatprep.subr.mxu0 0.0
    %361 = vmatpush1.msra.mxu0 0.0
    %362 = vmatprep.subr.mxu0 0.0
    %363 = vmatpush1.msra.mxu0 0.0
    %364 = vmatprep.subr.mxu0 0.0
    %365 = vmatpush1.msra.mxu0 0.0
    %366 = vmatprep.subr.mxu0 0.0
    %367 = vmatpush1.msra.mxu0 0.0
    %368 = vmatprep.subr.mxu0 0.0
    %369 = vmatpush1.msra.mxu0 0.0
    %370 = vmatprep.mubr.f32.mxu0 0.0
    %371 = vmatmul.mubr.f32.gmra.mrb[0].mxu0 %v83
    %v372 = vpop.f32.mrb[0].mxu0
    %v373 = vadd.f32 0.0, %v372
    %v374 = vpop.f32.mrb[0].mxu0
    %375 = vdwg.mxu0
    %v376 = vld [vmem:[%s4] sm:$0x3]
    %v378 = vlaneseq
    %v379 = vshrl.u32 %v378, 7
    %v380 = vsub.s32 0, %v379
    %v381 = vrot.slane %v376, %v380
    %v382 = vlaneseq
    %v383 = vshrl.u32 %v382, 7
    %v384 = vsub.s32 1, %v383
    %v385 = vrot.slane %v376, %v384
    %v388 = vadd.f32 %v302, %v381
    %v389 = vadd.f32 %v304, %v385
    %v390 = vld [vmem:[%s5] sm:$0x1]
    %v392 = vlaneseq
    %v393 = vshrl.u32 %v392, 7
    %v394 = vsub.s32 0, %v393
    %v395 = vrot.slane %v390, %v394
    %v397 = vadd.f32 %v373, %v395
    %v398 = vmul.f32 %v83, %v83
    %399 = vadd.xlane.f32.xlu0 %v398
    %v400 = vpop.xlane.xlu0 %399
    %v401 = vld [vmem:[%s3] sm:$0x3]
    %v403 = vlaneseq
    %v404 = vshrl.u32 %v403, 7
    %v405 = vsub.s32 0, %v404
    %v406 = vrot.slane %v401, %v405
    %v407 = vlaneseq
    %v408 = vshrl.u32 %v407, 7
    %v409 = vsub.s32 1, %v408
    %v410 = vrot.slane %v401, %v409
    %v413 = vadd.f32 %v400, %v406
    %v414 = vadd.f32 %v400, %v410
    %v415 = vmul.f32 %v231, 2.0
    %v416 = vmul.f32 %v233, 2.0
    %v417 = vsub.f32 %v413, %v415
    %v418 = vsub.f32 %v414, %v416
    %v419 = vmin.f32 %v417, %v418
    %420 = vmin.xlane.f32.xlu0 %v419
    %v421 = vpop.xlane.xlu0 %420
    %v422 = vmax.f32 %v421, 0.01
    %v423 = vmin.f32 %v422, 1000000.0
    %v424 = vrsqrt.pop %v423
    %v425 = vmul.f32 %v424, 10.0
    %v426 = vmax.f32 %v388, %v389
    %427 = vmax.xlane.f32.xlu0 %v426
    %v428 = vpop.xlane.xlu0 %427
    %v429 = vsub.f32 %v388, %v428
    %v430 = vsub.f32 %v389, %v428
    %v431 = vmul.f32 %v429, 1.442695
    %v432 = vpow.pop %v431
    %v433 = vmul.f32 %v430, 1.442695
    %v434 = vpow.pop %v433
    %v435 = vadd.f32 %v432, %v434
    %436 = vadd.xlane.f32.xlu0 %v435
    %v437 = vpop.xlane.xlu0 %436
    %v438 = vrcp.pop %v437
    %v439 = vmul.f32 %v432, %v438
    %v440 = vmul.f32 %v434, %v438
    %v441 = vld [vmem:[#allocation7] sm:$0xff]
    %v442 = vld [vmem:[#allocation7 + $0x8] sm:$0xff]
    %v443 = vld [vmem:[#allocation7 + $0x10] sm:$0xff]
    %v444 = vld [vmem:[#allocation7 + $0x18] sm:$0xff]
    %v445 = vld [vmem:[#allocation7 + $0x20] sm:$0xff]
    %v446 = vld [vmem:[#allocation7 + $0x28] sm:$0xff]
    %v447 = vld [vmem:[#allocation7 + $0x30] sm:$0xff]
    %v448 = vld [vmem:[#allocation7 + $0x38] sm:$0xff]
    %v449 = vld [vmem:[#allocation7 + $0x40] sm:$0xff]
    %v450 = vld [vmem:[#allocation7 + $0x48] sm:$0xff]
    %v451 = vld [vmem:[#allocation7 + $0x50] sm:$0xff]
    %v452 = vld [vmem:[#allocation7 + $0x58] sm:$0xff]
    %v453 = vld [vmem:[#allocation7 + $0x60] sm:$0xff]
    %v454 = vld [vmem:[#allocation7 + $0x68] sm:$0xff]
    %v455 = vld [vmem:[#allocation7 + $0x70] sm:$0xff]
    %v456 = vld [vmem:[#allocation7 + $0x78] sm:$0xff]
    %v457 = vld [vmem:[#allocation7 + $0x80] sm:$0xff]
    %v458 = vld [vmem:[#allocation7 + $0x88] sm:$0xff]
    %v459 = vld [vmem:[#allocation7 + $0x90] sm:$0xff]
    %v460 = vld [vmem:[#allocation7 + $0x98] sm:$0xff]
    %v461 = vld [vmem:[#allocation7 + $0xa0] sm:$0xff]
    %v462 = vld [vmem:[#allocation7 + $0xa8] sm:$0xff]
    %v463 = vld [vmem:[#allocation7 + $0xb0] sm:$0xff]
    %v464 = vld [vmem:[#allocation7 + $0xb8] sm:$0xff]
    %v465 = vld [vmem:[#allocation7 + $0xc0] sm:$0xff]
    %v466 = vld [vmem:[#allocation7 + $0xc8] sm:$0xff]
    %v467 = vld [vmem:[#allocation7 + $0xd0] sm:$0xff]
    %v468 = vld [vmem:[#allocation7 + $0xd8] sm:$0xff]
    %v469 = vld [vmem:[#allocation7 + $0xe0] sm:$0xff]
    %v470 = vld [vmem:[#allocation7 + $0xe8] sm:$0xff]
    %v471 = vld [vmem:[#allocation7 + $0xf0] sm:$0xff]
    %v472 = vld [vmem:[#allocation7 + $0xf8] sm:$0xff]
    %473 = vmatprep.subr.mxu0 0.0
    %474 = vmatpush1.msra.mxu0 %v441
    %475 = vmatprep.subr.mxu0 0.0
    %476 = vmatpush1.msra.mxu0 %v442
    %477 = vmatprep.subr.mxu0 0.0
    %478 = vmatpush1.msra.mxu0 %v443
    %479 = vmatprep.subr.mxu0 0.0
    %480 = vmatpush1.msra.mxu0 %v444
    %481 = vmatprep.subr.mxu0 0.0
    %482 = vmatpush1.msra.mxu0 %v445
    %483 = vmatprep.subr.mxu0 0.0
    %484 = vmatpush1.msra.mxu0 %v446
    %485 = vmatprep.subr.mxu0 0.0
    %486 = vmatpush1.msra.mxu0 %v447
    %487 = vmatprep.subr.mxu0 0.0
    %488 = vmatpush1.msra.mxu0 %v448
    %489 = vmatprep.subr.mxu0 0.0
    %490 = vmatpush1.msra.mxu0 %v449
    %491 = vmatprep.subr.mxu0 0.0
    %492 = vmatpush1.msra.mxu0 %v450
    %493 = vmatprep.subr.mxu0 0.0
    %494 = vmatpush1.msra.mxu0 %v451
    %495 = vmatprep.subr.mxu0 0.0
    %496 = vmatpush1.msra.mxu0 %v452
    %497 = vmatprep.subr.mxu0 0.0
    %498 = vmatpush1.msra.mxu0 %v453
    %499 = vmatprep.subr.mxu0 0.0
    %500 = vmatpush1.msra.mxu0 %v454
    %501 = vmatprep.subr.mxu0 0.0
    %502 = vmatpush1.msra.mxu0 %v455
    %503 = vmatprep.subr.mxu0 0.0
    %504 = vmatpush1.msra.mxu0 %v456
    %505 = vmatprep.subr.mxu0 0.0
    %506 = vmatpush1.msra.mxu0 %v457
    %507 = vmatprep.subr.mxu0 0.0
    %508 = vmatpush1.msra.mxu0 %v458
    %509 = vmatprep.subr.mxu0 0.0
    %510 = vmatpush1.msra.mxu0 %v459
    %511 = vmatprep.subr.mxu0 0.0
    %512 = vmatpush1.msra.mxu0 %v460
    %513 = vmatprep.subr.mxu0 0.0
    %514 = vmatpush1.msra.mxu0 %v461
    %515 = vmatprep.subr.mxu0 0.0
    %516 = vmatpush1.msra.mxu0 %v462
    %517 = vmatprep.subr.mxu0 0.0
    %518 = vmatpush1.msra.mxu0 %v463
    %519 = vmatprep.subr.mxu0 0.0
    %520 = vmatpush1.msra.mxu0 %v464
    %521 = vmatprep.subr.mxu0 0.0
    %522 = vmatpush1.msra.mxu0 %v465
    %523 = vmatprep.subr.mxu0 0.0
    %524 = vmatpush1.msra.mxu0 %v466
    %525 = vmatprep.subr.mxu0 0.0
    %526 = vmatpush1.msra.mxu0 %v467
    %527 = vmatprep.subr.mxu0 0.0
    %528 = vmatpush1.msra.mxu0 %v468
    %529 = vmatprep.subr.mxu0 0.0
    %530 = vmatpush1.msra.mxu0 %v469
    %531 = vmatprep.subr.mxu0 0.0
    %532 = vmatpush1.msra.mxu0 %v470
    %533 = vmatprep.subr.mxu0 0.0
    %534 = vmatpush1.msra.mxu0 %v471
    %535 = vmatprep.subr.mxu0 0.0
    %536 = vmatpush1.msra.mxu0 %v472
    %537 = vmatprep.mubr.f32.mxu0 %v440
    %538 = vmatmul.mubr.f32.gmra.mrb[0].mxu0 %v439
    %v539 = vpop.f32.mrb[0].mxu0
    %v540 = vadd.f32 0.0, %v539
    %v541 = vpop.f32.mrb[0].mxu0
    %542 = vdwg.mxu0
    %v543 = vtanh.pop %v397
    %v544 = vmul.f32 %v543, %v540
    %v545 = vadd.f32 %v83, %v544
    %v546 = vmul.f32 %v425, %v545
    %v547 = vmul.f32 %v546, %v546
    %548 = vadd.xlane.f32.xlu0 %v547
    %v549 = vpop.xlane.xlu0 %548
    %v550 = vrsqrt.pop %v549
    %v551 = vmul.f32 %v549, %v550
    %vm552 = vcmp.eq.f32.partialorder %v549, inf
    %v553 = vsel %vm552, %v549, %v551
    %vm554 = vcmp.eq.f32.partialorder %v549, 0.0
    %v555 = vand.u32 %v549, 2147483648
    %v556 = vsel %vm554, %v555, %v553
    %v557 = vadd.f32 %v556, 1.0
    %v558 = vrcp.pop %v557
    %v559 = vmul.f32 %v546, %v558
    %v560 = vld [vmem:[#allocation8] sm:$0xff]
    %v561 = vld [vmem:[#allocation8 + $0x8] sm:$0xff]
    %v562 = vld [vmem:[#allocation8 + $0x10] sm:$0xff]
    %v563 = vld [vmem:[#allocation8 + $0x18] sm:$0xff]
    %v564 = vld [vmem:[#allocation8 + $0x20] sm:$0xff]
    %v565 = vld [vmem:[#allocation8 + $0x28] sm:$0xff]
    %v566 = vld [vmem:[#allocation8 + $0x30] sm:$0xff]
    %v567 = vld [vmem:[#allocation8 + $0x38] sm:$0xff]
    %v568 = vld [vmem:[#allocation8 + $0x40] sm:$0xff]
    %v569 = vld [vmem:[#allocation8 + $0x48] sm:$0xff]
    %v570 = vld [vmem:[#allocation8 + $0x50] sm:$0xff]
    %v571 = vld [vmem:[#allocation8 + $0x58] sm:$0xff]
    %v572 = vld [vmem:[#allocation8 + $0x60] sm:$0xff]
    %v573 = vld [vmem:[#allocation8 + $0x68] sm:$0xff]
    %v574 = vld [vmem:[#allocation8 + $0x70] sm:$0xff]
    %v575 = vld [vmem:[#allocation8 + $0x78] sm:$0xff]
    %v576 = vld [vmem:[#allocation8 + $0x80] sm:$0xff]
    %v577 = vld [vmem:[#allocation8 + $0x88] sm:$0xff]
    %v578 = vld [vmem:[#allocation8 + $0x90] sm:$0xff]
    %v579 = vld [vmem:[#allocation8 + $0x98] sm:$0xff]
    %v580 = vld [vmem:[#allocation8 + $0xa0] sm:$0xff]
    %v581 = vld [vmem:[#allocation8 + $0xa8] sm:$0xff]
    %v582 = vld [vmem:[#allocation8 + $0xb0] sm:$0xff]
    %v583 = vld [vmem:[#allocation8 + $0xb8] sm:$0xff]
    %v584 = vld [vmem:[#allocation8 + $0xc0] sm:$0xff]
    %v585 = vld [vmem:[#allocation8 + $0xc8] sm:$0xff]
    %v586 = vld [vmem:[#allocation8 + $0xd0] sm:$0xff]
    %v587 = vld [vmem:[#allocation8 + $0xd8] sm:$0xff]
    %v588 = vld [vmem:[#allocation8 + $0xe0] sm:$0xff]
    %v589 = vld [vmem:[#allocation8 + $0xe8] sm:$0xff]
    %v590 = vld [vmem:[#allocation8 + $0xf0] sm:$0xff]
    %v591 = vld [vmem:[#allocation8 + $0xf8] sm:$0xff]
    %592 = vmatprep.subr.mxu0 %v561
    %593 = vmatpush1.msra.mxu0 %v560
    %594 = vmatprep.subr.mxu0 %v563
    %595 = vmatpush1.msra.mxu0 %v562
    %596 = vmatprep.subr.mxu0 %v565
    %597 = vmatpush1.msra.mxu0 %v564
    %598 = vmatprep.subr.mxu0 %v567
    %599 = vmatpush1.msra.mxu0 %v566
    %600 = vmatprep.subr.mxu0 %v569
    %601 = vmatpush1.msra.mxu0 %v568
    %602 = vmatprep.subr.mxu0 %v571
    %603 = vmatpush1.msra.mxu0 %v570
    %604 = vmatprep.subr.mxu0 %v573
    %605 = vmatpush1.msra.mxu0 %v572
    %606 = vmatprep.subr.mxu0 %v575
    %607 = vmatpush1.msra.mxu0 %v574
    %608 = vmatprep.subr.mxu0 %v577
    %609 = vmatpush1.msra.mxu0 %v576
    %610 = vmatprep.subr.mxu0 %v579
    %611 = vmatpush1.msra.mxu0 %v578
    %612 = vmatprep.subr.mxu0 %v581
    %613 = vmatpush1.msra.mxu0 %v580
    %614 = vmatprep.subr.mxu0 %v583
    %615 = vmatpush1.msra.mxu0 %v582
    %616 = vmatprep.subr.mxu0 %v585
    %617 = vmatpush1.msra.mxu0 %v584
    %618 = vmatprep.subr.mxu0 %v587
    %619 = vmatpush1.msra.mxu0 %v586
    %620 = vmatprep.subr.mxu0 %v589
    %621 = vmatpush1.msra.mxu0 %v588
    %622 = vmatprep.subr.mxu0 %v591
    %623 = vmatpush1.msra.mxu0 %v590
    %624 = vmatprep.subr.mxu0 0.0
    %625 = vmatpush1.msra.mxu0 0.0
    %626 = vmatprep.subr.mxu0 0.0
    %627 = vmatpush1.msra.mxu0 0.0
    %628 = vmatprep.subr.mxu0 0.0
    %629 = vmatpush1.msra.mxu0 0.0
    %630 = vmatprep.subr.mxu0 0.0
    %631 = vmatpush1.msra.mxu0 0.0
    %632 = vmatprep.subr.mxu0 0.0
    %633 = vmatpush1.msra.mxu0 0.0
    %634 = vmatprep.subr.mxu0 0.0
    %635 = vmatpush1.msra.mxu0 0.0
    %636 = vmatprep.subr.mxu0 0.0
    %637 = vmatpush1.msra.mxu0 0.0
    %638 = vmatprep.subr.mxu0 0.0
    %639 = vmatpush1.msra.mxu0 0.0
    %640 = vmatprep.subr.mxu0 0.0
    %641 = vmatpush1.msra.mxu0 0.0
    %642 = vmatprep.subr.mxu0 0.0
    %643 = vmatpush1.msra.mxu0 0.0
    %644 = vmatprep.subr.mxu0 0.0
    %645 = vmatpush1.msra.mxu0 0.0
    %646 = vmatprep.subr.mxu0 0.0
    %647 = vmatpush1.msra.mxu0 0.0
    %648 = vmatprep.subr.mxu0 0.0
    %649 = vmatpush1.msra.mxu0 0.0
    %650 = vmatprep.subr.mxu0 0.0
    %651 = vmatpush1.msra.mxu0 0.0
    %652 = vmatprep.subr.mxu0 0.0
    %653 = vmatpush1.msra.mxu0 0.0
    %654 = vmatprep.subr.mxu0 0.0
    %655 = vmatpush1.msra.mxu0 0.0
    %656 = vmatprep.mubr.f32.mxu0 0.0
    %657 = vmatmul.mubr.f32.gmra.mrb[0].mxu0 %v559
    %v658 = vpop.f32.mrb[0].mxu0
    %v659 = vadd.f32 0.0, %v658
    %v660 = vpop.f32.mrb[0].mxu0
    %v661 = vadd.f32 0.0, %v660
    %662 = vdwg.mxu0
    %v663 = vld [vmem:[%s7] sm:$0x3]
    %v665 = vlaneseq
    %v666 = vshrl.u32 %v665, 7
    %v667 = vsub.s32 0, %v666
    %v668 = vrot.slane %v663, %v667
    %v669 = vlaneseq
    %v670 = vshrl.u32 %v669, 7
    %v671 = vsub.s32 1, %v670
    %v672 = vrot.slane %v663, %v671
    %v675 = vmul.f32 %v659, %v668
    %v676 = vmul.f32 %v661, %v672
    %677 = vst [vmem:[#allocation10] sm:$0xff] %v675
    %678 = vst [vmem:[#allocation10 + $0x8] sm:$0xff] %v676
    // Predicated region
    $region50: #{tpu_custom_call.1} parent=1 // pred_check
      _
    $region51: #{tpu_custom_call.1} parent=1 // pred_check_branch
      %680 = sbr.rel (0) target = $region53
    $region52: #{tpu_custom_call.1} parent=1 // pred_region
      %s682 = ssub.s32 256, 256
      %683 = vsyncadd [#allocation4], %s682
      %s685 = sshll.u32 [#allocation10], 4
      %s686 = int_to_ptr.vmem [resolvable:$true] %s685
      %688 = dma.vmem_to_hbm [thread:$0]  %s686, 256, %s8, [#allocation4]
    $region53: #{tpu_custom_call.1} parent=1 // pred_fallthru
      _
    // Predicated region
    $region54: #{tpu_custom_call.1} parent=1 // pred_check
      _
    $region55: #{tpu_custom_call.1} parent=1 // pred_check_branch
      %690 = sbr.rel (0) target = $region57
    $region56: #{tpu_custom_call.1} parent=1 // pred_region
      %691 = dma.done [#allocation4], 256
    $region57: #{tpu_custom_call.1} parent=1 // pred_fallthru
      _
    %692 = vsyncpa [#allocation3], 1
    %693 = vsyncpa [#allocation6], 1
    %694 = vsyncpa [#allocation9], 1
    %695 = vsyncpa [#allocation4], 1

</llo_original>
